<compile_context>
chip_gen: v5e
topology: v5e:2x2
jax: 0.10.0
libtpu: 0.0.40
codegen_flags: <defaults>
</compile_context>

<pallas_src>
from functools import partial

import jax
import jax.numpy as jnp
from jax.experimental import pallas as pl
from jax.experimental.pallas import tpu as pltpu


# ----------------------------------------------------------------------------
# helpers
# ----------------------------------------------------------------------------

_SQRT_HALF = 0.7071067811865476
_LN_EPS = 1e-5


def _erf_approx(z):
    # Abramowitz & Stegun 7.1.26 rational approximation (|err| < 1.5e-7),
    # built only from elementwise ops with guaranteed Mosaic lowerings.
    a1, a2, a3, a4, a5 = (0.254829592, -0.284496736, 1.421413741,
                          -1.453152027, 1.061405429)
    p = 0.3275911
    az = jnp.abs(z)
    t = 1.0 / (1.0 + p * az)
    poly = ((((a5 * t + a4) * t + a3) * t + a2) * t + a1) * t
    y = 1.0 - poly * jnp.exp(-az * az)
    return jnp.where(z >= 0, y, -y)


def _gelu_exact(x):
    # Matches nn.GELU() (erf-based, not tanh approximation).
    return 0.5 * x * (1.0 + _erf_approx(x * _SQRT_HALF))


def _layer_norm(x, w, b, eps):
    mu = jnp.mean(x, axis=-1, keepdims=True)
    xc = x - mu
    var = jnp.mean(xc * xc, axis=-1, keepdims=True)
    return xc * jax.lax.rsqrt(var + eps) * w + b


# ----------------------------------------------------------------------------
# Kernel Q: q projection (computed once, batch-invariant; scale pre-folded)
# ----------------------------------------------------------------------------

def _q_proj_kernel(qtok_ref, wq_ref, bq_ref, o_ref):
    acc = jnp.dot(qtok_ref[...], wq_ref[...], preferred_element_type=jnp.float32)
    o_ref[...] = (acc + bq_ref[...]).astype(o_ref.dtype)


def q_project(qtok, wq, bq):
    """qtok: (nq, D), wq: (D, D) pre-scaled, bq: (D,) pre-scaled -> (nq, D)."""
    nq, D = qtok.shape
    return pl.pallas_call(
        _q_proj_kernel,
        out_shape=jax.ShapeDtypeStruct((nq, D), qtok.dtype),
        grid_spec=pltpu.PrefetchScalarGridSpec(
            num_scalar_prefetch=0,
            grid=(1,),
            in_specs=[
                pl.BlockSpec((nq, D), lambda i: (0, 0)),
                pl.BlockSpec((D, D), lambda i: (0, 0)),
                pl.BlockSpec((1, D), lambda i: (0, 0)),
            ],
            out_specs=pl.BlockSpec((nq, D), lambda i: (0, 0)),
        ),
        compiler_params=pltpu.CompilerParams(
            dimension_semantics=("arbitrary",)),
    )(qtok, wq, bq.reshape(1, D))


# ----------------------------------------------------------------------------
# Kernel A: fused LayerNorm + K/V projections (one pass over x)
# ----------------------------------------------------------------------------

def _ln_kv_kernel(x_ref, lnw_ref, lnb_ref, wk_ref, bk_ref, wv_ref, bv_ref,
                  k_ref, v_ref, *, eps):
    x = x_ref[...].astype(jnp.float32)
    xn = _layer_norm(x, lnw_ref[...], lnb_ref[...], eps)
    k = jnp.dot(xn, wk_ref[...], preferred_element_type=jnp.float32) + bk_ref[...]
    v = jnp.dot(xn, wv_ref[...], preferred_element_type=jnp.float32) + bv_ref[...]
    k_ref[...] = k.astype(k_ref.dtype)
    v_ref[...] = v.astype(v_ref.dtype)


def ln_kv_project(x2d, ln_w, ln_b, wk, bk, wv, bv, *, eps=_LN_EPS, tm_target=512):
    """x2d: (M, D), wk/wv: (D, D) pre-transposed -> (k, v) each (M, D)."""
    M, D = x2d.shape
    # Large row tiles (mem/MXU friendly); no wrapper padding -- partial last
    # block is masked by Pallas (grid = cdiv).
    tm = M if M <= tm_target else tm_target
    grid = (pl.cdiv(M, tm),)

    flops = 2 * M * D * (2 * D)
    bytes_accessed = 4 * (3 * M * D + 2 * D * D + 4 * D)

    k, v = pl.pallas_call(
        partial(_ln_kv_kernel, eps=eps),
        out_shape=(jax.ShapeDtypeStruct((M, D), x2d.dtype),
                   jax.ShapeDtypeStruct((M, D), x2d.dtype)),
        grid_spec=pltpu.PrefetchScalarGridSpec(
            num_scalar_prefetch=0,
            grid=grid,
            in_specs=[
                pl.BlockSpec((tm, D), lambda i: (i, 0)),
                pl.BlockSpec((1, D), lambda i: (0, 0)),   # ln weight (resident)
                pl.BlockSpec((1, D), lambda i: (0, 0)),   # ln bias   (resident)
                pl.BlockSpec((D, D), lambda i: (0, 0)),   # Wk        (resident)
                pl.BlockSpec((1, D), lambda i: (0, 0)),   # bk
                pl.BlockSpec((D, D), lambda i: (0, 0)),   # Wv        (resident)
                pl.BlockSpec((1, D), lambda i: (0, 0)),   # bv
            ],
            out_specs=(pl.BlockSpec((tm, D), lambda i: (i, 0)),
                       pl.BlockSpec((tm, D), lambda i: (i, 0))),
        ),
        compiler_params=pltpu.CompilerParams(
            dimension_semantics=("parallel",)),
        cost_estimate=pl.CostEstimate(
            flops=flops, transcendentals=0, bytes_accessed=bytes_accessed),
    )(x2d, ln_w.reshape(1, D), ln_b.reshape(1, D),
      wk, bk.reshape(1, D), wv, bv.reshape(1, D))
    return k, v


# ----------------------------------------------------------------------------
# Kernel B: per-batch fused query path
#   multi-head SDPA + out-proj + residual + LN2 + fc1 + GELU + fc2 + residual
# ----------------------------------------------------------------------------

def _query_path_kernel(qtok_ref, qp_ref, k_ref, v_ref,
                       wproj_ref, bproj_ref, ln2w_ref, ln2b_ref,
                       wfc1_ref, bfc1_ref, wfc2_ref, bfc2_ref,
                       o_ref, *, num_heads, eps):
    qp = qp_ref[...].astype(jnp.float32)        # (nq, D), scale already folded
    k = k_ref[0].astype(jnp.float32)            # (N, D)
    v = v_ref[0].astype(jnp.float32)            # (N, D)
    nq, D = qp.shape
    dh = D // num_heads

    # All heads of this batch element in one grid step (static unroll).
    outs = []
    for h in range(num_heads):
        lo, hi = h * dh, (h + 1) * dh
        qh = qp[:, lo:hi]                       # (nq, dh)
        kh = k[:, lo:hi]                        # (N,  dh)
        vh = v[:, lo:hi]
        # qh @ kh^T without materializing a transpose.
        s = jax.lax.dot_general(qh, kh, (((1,), (1,)), ((), ())),
                                preferred_element_type=jnp.float32)
        m = jnp.max(s, axis=-1, keepdims=True)
        p = jnp.exp(s - m)
        l = jnp.sum(p, axis=-1, keepdims=True)
        oh = jnp.dot(p, vh, preferred_element_type=jnp.float32) / l
        outs.append(oh)
    o = jnp.concatenate(outs, axis=-1)          # (nq, D), head-major like torch

    # output projection + residual (fused)
    y = jnp.dot(o, wproj_ref[...], preferred_element_type=jnp.float32) + bproj_ref[...]
    q1 = qtok_ref[...].astype(jnp.float32) + y

    # LN2 + MLP (fc1 -> exact GELU -> fc2) + residual (fused)
    qn = _layer_norm(q1, ln2w_ref[...], ln2b_ref[...], eps)
    h1 = _gelu_exact(jnp.dot(qn, wfc1_ref[...], preferred_element_type=jnp.float32)
                     + bfc1_ref[...])
    q2 = q1 + jnp.dot(h1, wfc2_ref[...], preferred_element_type=jnp.float32) + bfc2_ref[...]

    o_ref[0] = q2.astype(o_ref.dtype)


def cross_attn_query_path(qtok, qp, K, V, wproj, bproj, ln2w, ln2b,
                          wfc1, bfc1, wfc2, bfc2, *, num_heads, eps=_LN_EPS):
    """qtok/qp: (nq, D); K/V: (B, N, D) -> (B, nq, D)."""
    B, N, D = K.shape
    nq = qtok.shape[0]
    Hm = wfc1.shape[1]

    return pl.pallas_call(
        partial(_query_path_kernel, num_heads=num_heads, eps=eps),
        out_shape=jax.ShapeDtypeStruct((B, nq, D), qtok.dtype),
        grid_spec=pltpu.PrefetchScalarGridSpec(
            num_scalar_prefetch=0,
            grid=(B,),
            in_specs=[
                pl.BlockSpec((nq, D), lambda b: (0, 0)),      # query tokens
                pl.BlockSpec((nq, D), lambda b: (0, 0)),      # projected queries
                pl.BlockSpec((1, N, D), lambda b: (b, 0, 0)), # K
                pl.BlockSpec((1, N, D), lambda b: (b, 0, 0)), # V
                pl.BlockSpec((D, D), lambda b: (0, 0)),       # Wproj (resident)
                pl.BlockSpec((1, D), lambda b: (0, 0)),       # bproj
                pl.BlockSpec((1, D), lambda b: (0, 0)),       # ln2 w
                pl.BlockSpec((1, D), lambda b: (0, 0)),       # ln2 b
                pl.BlockSpec((D, Hm), lambda b: (0, 0)),      # Wfc1 (resident)
                pl.BlockSpec((1, Hm), lambda b: (0, 0)),      # bfc1
                pl.BlockSpec((Hm, D), lambda b: (0, 0)),      # Wfc2 (resident)
                pl.BlockSpec((1, D), lambda b: (0, 0)),       # bfc2
            ],
            out_specs=pl.BlockSpec((1, nq, D), lambda b: (b, 0, 0)),
        ),
        compiler_params=pltpu.CompilerParams(
            dimension_semantics=("parallel",)),
    )(qtok, qp, K, V,
      wproj, bproj.reshape(1, D), ln2w.reshape(1, D), ln2b.reshape(1, D),
      wfc1, bfc1.reshape(1, Hm), wfc2, bfc2.reshape(1, D))


# ----------------------------------------------------------------------------
# parameter prep (one-time) + forward
# ----------------------------------------------------------------------------

def prepare_params(params, *, num_heads):
    """One-time prep: fold attention scale into Wq/bq, split Wkv into Wk/Wv.

    All linear weights are already stored pre-transposed in (in, out) layout.
    """
    D = params["Wq"].shape[0]
    dh = D // num_heads
    scale = dh ** (-0.5)
    p = dict(params)
    p["Wq"] = params["Wq"] * scale
    p["bq"] = params["bq"] * scale
    p["Wk"] = params["Wkv"][:, :D]
    p["bk"] = params["bkv"][:D]
    p["Wv"] = params["Wkv"][:, D:]
    p["bv"] = params["bkv"][D:]
    del p["Wkv"], p["bkv"]
    return p


def attentive_pooler_forward(x, kp, *, num_heads):
    """x: (B, N, D), kp: prepared params -> (B, nq, D)."""
    B, N, D = x.shape
    qtok = kp["query_tokens"].reshape(-1, D)                 # (nq, D), batch-invariant

    # q projection once (batch-invariant, scale folded into Wq/bq).
    qp = q_project(qtok, kp["Wq"], kp["bq"])

    # LN1 fused into the K / V projections; one pass over (B*N, D).
    k2d, v2d = ln_kv_project(x.reshape(B * N, D),
                             kp["ln1_w"], kp["ln1_b"],
                             kp["Wk"], kp["bk"], kp["Wv"], kp["bv"])
    K = k2d.reshape(B, N, D)   # free metadata reshape, no HBM copy
    V = v2d.reshape(B, N, D)

    # Fused per-batch query path: SDPA + proj + residual + LN2 + MLP + residual.
    return cross_attn_query_path(qtok, qp, K, V,
                                 kp["Wproj"], kp["bproj"],
                                 kp["ln2_w"], kp["ln2_b"],
                                 kp["Wfc1"], kp["bfc1"],
                                 kp["Wfc2"], kp["bfc2"],
                                 num_heads=num_heads)


# ----------------------------------------------------------------------------
# pure-JAX reference (mirrors the PyTorch module math, unprepared params)
# ----------------------------------------------------------------------------

def attentive_pooler_reference(x, params, *, num_heads):
    def ln(z, w, b, eps=_LN_EPS):
        mu = jnp.mean(z, axis=-1, keepdims=True)
        var = jnp.mean((z - mu) ** 2, axis=-1, keepdims=True)
        return (z - mu) * jax.lax.rsqrt(var + eps) * w + b

    B, N, D = x.shape
    nq = params["query_tokens"].shape[1]
    H = num_heads
    Dh = D // H

    q = jnp.broadcast_to(params["query_tokens"], (B, nq, D))
    xs = ln(x, params["ln1_w"], params["ln1_b"])

    qh = (q @ params["Wq"] + params["bq"]).reshape(B, nq, H, Dh).transpose(0, 2, 1, 3)
    kv = (xs @ params["Wkv"] + params["bkv"]).reshape(B, N, 2, H, Dh)
    kv = kv.transpose(2, 0, 3, 1, 4)
    k, v = kv[0], kv[1]

    s = jnp.einsum("bhnd,bhmd->bhnm", qh, k) * (Dh ** (-0.5))
    p = jax.nn.softmax(s, axis=-1)
    o = jnp.einsum("bhnm,bhmd->bhnd", p, v).transpose(0, 2, 1, 3).reshape(B, nq, D)
    y = o @ params["Wproj"] + params["bproj"]
    q = q + y

    qn = ln(q, params["ln2_w"], params["ln2_b"])
    h = jax.nn.gelu(qn @ params["Wfc1"] + params["bfc1"], approximate=False)
    q = q + (h @ params["Wfc2"] + params["bfc2"])
    return q


# ----------------------------------------------------------------------------
# test
# ----------------------------------------------------------------------------

if __name__ == "__main__":
    # Small, module-consistent shapes: batch=2, seq=8, embed_dim=32,
    # num_heads=4 (head_dim=8), num_queries=2, mlp_ratio=4 -> hidden=128.
    B, N, D = 2, 8, 32
    num_heads = 4
    num_queries = 2
    hidden = int(D * 4.0)

    key = jax.random.PRNGKey(0)
    ks = jax.random.split(key, 16)

    def nrm(k, shape, std):
        return std * jax.random.normal(k, shape, dtype=jnp.float32)

    # NOTE: all linear weights are stored pre-transposed to (in, out) layout.
    params = {
        "query_tokens": nrm(ks[0], (1, num_queries, D), 1.0),
        "ln1_w": 1.0 + nrm(ks[1], (D,), 0.1),
        "ln1_b": nrm(ks[2], (D,), 0.05),
        "Wq": nrm(ks[3], (D, D), 0.1),
        "bq": nrm(ks[4], (D,), 0.02),
        "Wkv": nrm(ks[5], (D, 2 * D), 0.1),
        "bkv": nrm(ks[6], (2 * D,), 0.02),
        "Wproj": nrm(ks[7], (D, D), 0.1),
        "bproj": nrm(ks[8], (D,), 0.02),
        "ln2_w": 1.0 + nrm(ks[9], (D,), 0.1),
        "ln2_b": nrm(ks[10], (D,), 0.05),
        "Wfc1": nrm(ks[11], (D, hidden), 0.1),
        "bfc1": nrm(ks[12], (hidden,), 0.02),
        "Wfc2": nrm(ks[13], (hidden, D), 0.1),
        "bfc2": nrm(ks[14], (D,), 0.02),
    }
    x = jax.random.normal(ks[15], (B, N, D), dtype=jnp.float32)

    kparams = prepare_params(params, num_heads=num_heads)
    out = attentive_pooler_forward(x, kparams, num_heads=num_heads)
    out = jax.block_until_ready(out)

    ref = attentive_pooler_reference(x, params, num_heads=num_heads)
    assert out.shape == (B, num_queries, D)
    max_diff = float(jnp.max(jnp.abs(out - ref)))
    assert jnp.allclose(out, ref, atol=1e-4, rtol=1e-4), f"mismatch: {max_diff}"

    print("KERNEL_OK")
</pallas_src>

<mosaic_0001>
module attributes {stable_mosaic.version = 11 : i64} {
  func.func @_q_proj_kernel(%arg0: i32, %arg1: memref<2x32xf32, #tpu.memory_space<vmem>>, %arg2: memref<32x32xf32, #tpu.memory_space<vmem>>, %arg3: memref<1x32xf32, #tpu.memory_space<vmem>>, %arg4: memref<2x32xf32, #tpu.memory_space<vmem>>) attributes {dimension_semantics = [#tpu.dimension_semantics<arbitrary>], iteration_bounds = array<i64: 1>, scalar_prefetch = 0 : i64, scratch_operands = 0 : i64, tpu.core_type = #tpu.core_type<tc>, window_params = [{pipeline_mode = #tpu.pipeline_mode<synchronous>, transform_indices = @transform_0, window_bounds = array<i64: 2, 32>}, {pipeline_mode = #tpu.pipeline_mode<synchronous>, transform_indices = @transform_1, window_bounds = array<i64: 32, 32>}, {pipeline_mode = #tpu.pipeline_mode<synchronous>, transform_indices = @transform_2, window_bounds = array<i64: 1, 32>}, {pipeline_mode = #tpu.pipeline_mode<synchronous>, transform_indices = @transform_3, window_bounds = array<i64: 2, 32>}]} {
    %c0 = arith.constant 0 : index
    %c0_0 = arith.constant 0 : index
    %0 = vector.load %arg1[%c0, %c0_0] : memref<2x32xf32, #tpu.memory_space<vmem>>, vector<2x32xf32>
    %c0_1 = arith.constant 0 : index
    %c0_2 = arith.constant 0 : index
    %1 = vector.load %arg2[%c0_1, %c0_2] : memref<32x32xf32, #tpu.memory_space<vmem>>, vector<32x32xf32>
    %cst = arith.constant dense<0.000000e+00> : vector<2x32xf32>
    %2 = tpu.matmul %0, %1, %cst {dimension_numbers = #tpu.dot_dimension_numbers<[1], [0], [0], [1], [0, 0, 1, 1], [], []>} : vector<2x32xf32>, vector<32x32xf32>, vector<2x32xf32> -> vector<2x32xf32>
    %c0_3 = arith.constant 0 : index
    %c0_4 = arith.constant 0 : index
    %3 = vector.load %arg3[%c0_3, %c0_4] : memref<1x32xf32, #tpu.memory_space<vmem>>, vector<1x32xf32>
    %4 = vector.broadcast %3 : vector<1x32xf32> to vector<2x32xf32>
    %5 = arith.addf %2, %4 : vector<2x32xf32>
    %c0_5 = arith.constant 0 : index
    %c0_6 = arith.constant 0 : index
    %6 = vector.load %arg4[%c0_5, %c0_6] : memref<2x32xf32, #tpu.memory_space<vmem>>, vector<2x32xf32>
    tpu.vector_store %arg4[%c0_5, %c0_6], %5 {strides = array<i32>} : memref<2x32xf32, #tpu.memory_space<vmem>>, vector<2x32xf32>,
    return
  }
  func.func @transform_0(%arg0: i32) -> (i32, i32) {
    %c0_i32 = arith.constant 0 : i32
    %c0_i32_0 = arith.constant 0 : i32
    %c0_i32_1 = arith.constant 0 : i32
    return %c0_i32, %c0_i32_0 : i32, i32
  }
  func.func @transform_1(%arg0: i32) -> (i32, i32) {
    %c0_i32 = arith.constant 0 : i32
    %c0_i32_0 = arith.constant 0 : i32
    %c0_i32_1 = arith.constant 0 : i32
    return %c0_i32, %c0_i32_0 : i32, i32
  }
  func.func @transform_2(%arg0: i32) -> (i32, i32) {
    %c0_i32 = arith.constant 0 : i32
    %c0_i32_0 = arith.constant 0 : i32
    %c0_i32_1 = arith.constant 0 : i32
    return %c0_i32, %c0_i32_0 : i32, i32
  }
  func.func @transform_3(%arg0: i32) -> (i32, i32) {
    %c0_i32 = arith.constant 0 : i32
    %c0_i32_0 = arith.constant 0 : i32
    %c0_i32_1 = arith.constant 0 : i32
    return %c0_i32, %c0_i32_0 : i32, i32
  }
}

</mosaic_0001>

<llo_original>
// kernel: tpu_custom_call.1
$region0: #{tpu_custom_call.1}
  #allocation0 [shape = 'u32[]', space=smem, size = 0x4, offset = 0x4, fixed_abs, tag = 'smem constant byte address 0x4 - core index']
  #allocation1 [shape = 'u32[72,128]{1,0:T(1,128)}', space=vmem, size = 0x9000, scoped, tag = 'internal scratch']
  %s0 = inlined_call_operand.hbm [shape: f32[2,32], index: 0, kind: input, shape index: {}]
  %s1 = inlined_call_operand.hbm [shape: f32[32,32], index: 1, kind: input, shape index: {}]
  %s2 = inlined_call_operand.vmem [shape: f32[1,32], index: 2, kind: input, shape index: {}]
  %s3 = inlined_call_operand.hbm [shape: f32[2,32], index: 3, kind: output, shape index: {}]
  %s4 = sld [smem:[#allocation0]]
  $region30: #{tpu_custom_call.1} parent=0
    _
  %s6 = ssub.s32 1, %s4
  %s7 = scalar_select 0, %s6, %s4
  $region1: #{tpu_custom_call.1} parent=0
    #allocation2 [shape = 'u8[1024]{0}', space=vmem, size = 0x400, scoped, tag = 'input window, operand 0, single buffered']
    #allocation3 [shape = 's32[1]{0}', space=sflag, size = 0x4, scoped, tag = 'scoped memory for tpu_custom_call.1']
    #allocation4 [shape = 's32[1]{0}', space=sflag, size = 0x4, scoped, tag = 'scoped memory for tpu_custom_call.1']
    #allocation5 [shape = 'u8[16384]{0}', space=vmem, size = 0x4000, scoped, tag = 'input window, operand 1, single buffered']
    #allocation6 [shape = 's32[1]{0}', space=sflag, size = 0x4, scoped, tag = 'scoped memory for tpu_custom_call.1']
    #allocation7 [shape = 'u8[1024]{0}', space=vmem, size = 0x400, scoped, tag = 'output window, operand 0, single buffered']
    %8 = vsyncpa [#allocation3], 0
    %9 = vsyncpa [#allocation6], 0
    %10 = vsyncpa [#allocation4], 0
    // Predicated region
    $region2: #{tpu_custom_call.1} parent=1 // pred_check
      _
    $region3: #{tpu_custom_call.1} parent=1 // pred_check_branch
      %12 = sbr.rel (0) target = $region5
    $region4: #{tpu_custom_call.1} parent=1 // pred_region
      %14 = vsyncadd [#allocation3], 0
      %s16 = sshll.u32 %s0, 4
      %s17 = int_to_ptr.hbm [resolvable:$true] %s16
      %s18 = sshll.u32 [#allocation2], 4
      %s19 = int_to_ptr.vmem [resolvable:$true] %s18
      %21 = dma.hbm_to_vmem [thread:$0]  %s17, 32, %s19, [#allocation3]
    $region5: #{tpu_custom_call.1} parent=1 // pred_fallthru
      _
    // Predicated region
    $region6: #{tpu_custom_call.1} parent=1 // pred_check
      _
    $region7: #{tpu_custom_call.1} parent=1 // pred_check_branch
      %23 = sbr.rel (0) target = $region9
    $region8: #{tpu_custom_call.1} parent=1 // pred_region
      %25 = vsyncadd [#allocation6], 0
      %s26 = sshll.u32 %s1, 4
      %s27 = int_to_ptr.hbm [resolvable:$true] %s26
      %s28 = sshll.u32 [#allocation5], 4
      %s29 = int_to_ptr.vmem [resolvable:$true] %s28
      %34 = dma.hbm_to_vmem [thread:$0]  %s27, 512, %s29, [#allocation6], 128, 128, 8
    $region9: #{tpu_custom_call.1} parent=1 // pred_fallthru
      _
    // Predicated region
    $region10: #{tpu_custom_call.1} parent=1 // pred_check
      _
    $region11: #{tpu_custom_call.1} parent=1 // pred_check_branch
      %36 = sbr.rel (0) target = $region13
    $region12: #{tpu_custom_call.1} parent=1 // pred_region
      _
    $region13: #{tpu_custom_call.1} parent=1 // pred_fallthru
      _
    // Predicated region
    $region14: #{tpu_custom_call.1} parent=1 // pred_check
      _
    $region15: #{tpu_custom_call.1} parent=1 // pred_check_branch
      %38 = sbr.rel (0) target = $region17
    $region16: #{tpu_custom_call.1} parent=1 // pred_region
      %40 = dma.done [#allocation3], 32
    $region17: #{tpu_custom_call.1} parent=1 // pred_fallthru
      _
    // Predicated region
    $region18: #{tpu_custom_call.1} parent=1 // pred_check
      _
    $region19: #{tpu_custom_call.1} parent=1 // pred_check_branch
      %42 = sbr.rel (0) target = $region21
    $region20: #{tpu_custom_call.1} parent=1 // pred_region
      %44 = dma.done [#allocation6], 512
    $region21: #{tpu_custom_call.1} parent=1 // pred_fallthru
      _
    %v45 = vld [vmem:[#allocation2] sm:$0x3]
    %v46 = vld [vmem:[#allocation5] sm:$0xff]
    %v47 = vld [vmem:[#allocation5 + $0x8] sm:$0xff]
    %v48 = vld [vmem:[#allocation5 + $0x10] sm:$0xff]
    %v49 = vld [vmem:[#allocation5 + $0x18] sm:$0xff]
    %v50 = vld [vmem:[%s2] sm:$0x1]
    %v52 = vperm.slane %v50, 0
    %vm54 = vcmask 261120
    %v56 = vsel %vm54, %v45, 0
    %58 = vmatpush.msra.mxu0 0.0
    %59 = vmatpush.msra.mxu0 0.0
    %60 = vmatpush.msra.mxu0 0.0
    %61 = vmatpush.msra.mxu0 0.0
    %62 = vmatpush.msra.mxu0 0.0
    %63 = vmatpush.msra.mxu0 0.0
    %64 = vmatpush.msra.mxu0 0.0
    %65 = vmatpush.msra.mxu0 0.0
    %66 = vmatpush.msra.mxu0 0.0
    %67 = vmatpush.msra.mxu0 0.0
    %68 = vmatpush.msra.mxu0 0.0
    %69 = vmatpush.msra.mxu0 0.0
    %70 = vmatpush.msra.mxu0 %v49
    %71 = vmatpush.msra.mxu0 %v48
    %72 = vmatpush.msra.mxu0 %v47
    %73 = vmatpush.msra.mxu0 %v46
    %74 = vmatmul.f32.gmra.mxu0 %v56
    %v75 = vpop.f32.mrf.mxu0
    %v76 = vadd.f32 %v52, %v75
    %77 = vdwg.mxu0
    %vm78 = vcmask 254976
    %79 = vst.msk [vmem:[#allocation7] sm:$0x3] %vm78, %v76
    // Predicated region
    $region22: #{tpu_custom_call.1} parent=1 // pred_check
      _
    $region23: #{tpu_custom_call.1} parent=1 // pred_check_branch
      %81 = sbr.rel (0) target = $region25
    $region24: #{tpu_custom_call.1} parent=1 // pred_region
      %83 = vsyncadd [#allocation4], 0
      %s85 = sshll.u32 [#allocation7], 4
      %s86 = int_to_ptr.vmem [resolvable:$true] %s85
      %s87 = sshll.u32 %s3, 4
      %s88 = int_to_ptr.hbm [resolvable:$true] %s87
      %90 = dma.vmem_to_hbm [thread:$0]  %s86, 32, %s88, [#allocation4]
    $region25: #{tpu_custom_call.1} parent=1 // pred_fallthru
      _
    // Predicated region
    $region26: #{tpu_custom_call.1} parent=1 // pred_check
      _
    $region27: #{tpu_custom_call.1} parent=1 // pred_check_branch
      %92 = sbr.rel (0) target = $region29
    $region28: #{tpu_custom_call.1} parent=1 // pred_region
      %94 = dma.done [#allocation4], 32
    $region29: #{tpu_custom_call.1} parent=1 // pred_fallthru
      _
    %95 = vsyncpa [#allocation3], 1
    %96 = vsyncpa [#allocation6], 1
    %97 = vsyncpa [#allocation4], 1

</llo_original>
